<compile_context>
chip_gen: v5e
topology: v5e:2x2
jax: 0.10.0
libtpu: 0.0.40
codegen_flags: <defaults>
</compile_context>

<pallas_src>
import math

import jax
import jax.numpy as jnp
from jax.experimental import pallas as pl
from jax.experimental.pallas import tpu as pltpu


def get_alibi_slopes(n_heads):
    """Python replica of AlibiAttentionBlock._get_alibi_slopes (list of floats)."""
    def get_slopes_power_of_2(n):
        start = 2 ** (-2 ** (-(math.log2(n) - 3)))
        return [start ** i for i in range(n)]

    if math.log2(n_heads).is_integer():
        return get_slopes_power_of_2(n_heads)
    closest_power = 2 ** math.floor(math.log2(n_heads))
    base = get_slopes_power_of_2(closest_power)
    extra = get_alibi_slopes(2 * closest_power)[0::2][: n_heads - closest_power]
    return base + extra


def _tensorcores_per_chip():
    """Best-effort detection of TensorCores addressable per device (megacore / dual-TC)."""
    try:
        kind = jax.devices()[0].device_kind.lower()
    except Exception:
        return 1
    # Single-TensorCore generations.
    if any(s in kind for s in ("v5 lite", "v5e", "v6 lite", "v6e")):
        return 1
    # Megacore (v4 / v5p) or dual-TensorCore (v7x) generations.
    if any(s in kind for s in ("v4", "v5p", "v5", "7")):
        return 2
    return 1


def alibi_attn_head_kernel(x_ref, wq_ref, wk_ref, wv_ref, bq_ref, bk_ref, bv_ref,
                           wo_ref, bo_ref, slopes_ref, base_ref,
                           o_ref, acc_ref):
    """Grid = (batch blocks, heads).  One (batch block, head) pair per step.

    x_ref     : (Bblk, L, D)   activations (input dtype)
    wq/wk/wv  : (1, D, hd)     bf16 per-head projection weights (Q pre-scaled by 1/sqrt(hd))
    bq/bk/bv  : (1, 1, hd)     f32 per-head projection biases  (Q pre-scaled)
    wo_ref    : (1, hd, D)     bf16 per-head rows of the out projection
    bo_ref    : (1, D)         f32 out-proj bias (constant block)
    slopes_ref: (H,)           f32 alibi slopes, resident in SMEM
    base_ref  : (L, L)         f32, -|i - j| (constant block)
    o_ref     : (Bblk, L, D)   output block (written on the last head step)
    acc_ref   : (Bblk*L, D)    f32 out-projection accumulator (VMEM scratch)
    """
    h = pl.program_id(1)
    Bblk, L, D = x_ref.shape
    hd = wq_ref.shape[2]
    M = Bblk * L

    # (Bblk, L, D) -> (M, D): leading-dim merge, last dim unchanged (layout-preserving).
    x = x_ref[...].reshape(M, D).astype(jnp.bfloat16)

    def project(w_ref, b_ref):
        # One (M, D) @ (D, hd) bf16 MXU matmul, f32 accumulate, + bias.
        y = jnp.dot(x, w_ref[0], preferred_element_type=jnp.float32) + b_ref[0]
        return y.reshape(Bblk, L, hd).astype(jnp.bfloat16)     # (Bblk, L, hd)

    q = project(wq_ref, bq_ref)       # 1/sqrt(hd) already folded into wq/bq
    k = project(wk_ref, bk_ref)
    v = project(wv_ref, bv_ref)

    # Batched scores over the whole batch block + alibi bias (slope * base).
    s = jnp.einsum('bld,bmd->blm', q, k, preferred_element_type=jnp.float32)
    s = s + slopes_ref[h] * base_ref[...]                      # (Bblk, L, L) f32

    # Softmax in f32; normalization via approx reciprocal (EUP slot).
    s = s - jnp.max(s, axis=-1, keepdims=True)
    p = jnp.exp(s)
    p = p * pl.reciprocal(jnp.sum(p, axis=-1, keepdims=True), approx=True)

    # Context: batched (Bblk, L, L) @ (Bblk, L, hd), f32 accumulate.
    ctx = jnp.einsum('blm,bmd->bld', p.astype(jnp.bfloat16), v,
                     preferred_element_type=jnp.float32)       # (Bblk, L, hd)
    ctx = ctx.reshape(M, hd).astype(jnp.bfloat16)

    # Out projection accumulated across the "arbitrary" head grid axis.
    @pl.when(h == 0)
    def _():
        acc_ref[...] = jnp.zeros_like(acc_ref)

    acc_ref[...] += jnp.dot(ctx, wo_ref[0], preferred_element_type=jnp.float32)

    @pl.when(h == pl.num_programs(1) - 1)
    def _():
        out = acc_ref[...] + bo_ref[...]                       # (M, D) f32
        o_ref[...] = out.reshape(Bblk, L, D).astype(o_ref.dtype)


def alibi_attention(x, wqkv_t, bqkv, wo_t, bo, n_heads, *, batch_block=None):
    """x: (B, L, D). wqkv_t: (D, 3D) (in,out). bqkv: (1, 3D). wo_t: (D, D) (in,out). bo: (1, D)."""
    B, L, D = x.shape
    assert D % n_heads == 0
    H = n_heads
    hd = D // H

    if batch_block is None:
        # Generation-aware: 1 grid step over batch on single-TC chips (v5e/v6e),
        # 2 "parallel" steps where a second TensorCore exists (v4/v5p/v7x).
        n_tc = _tensorcores_per_chip()
        batch_block = B if n_tc <= 1 else max(1, B // n_tc)
        while B % batch_block:
            batch_block -= 1
    assert B % batch_block == 0
    grid_b = B // batch_block

    # ---- Wrapper-side weight prep (all free w.r.t. the kernel). ------------
    scale = 1.0 / math.sqrt(hd)

    def to_heads(w):                       # (D, H*hd) [in, out] -> (H, D, hd)
        return jnp.transpose(w.reshape(D, H, hd), (1, 0, 2))

    wqkv_f32 = wqkv_t.astype(jnp.float32)
    wq_h = (to_heads(wqkv_f32[:, :D]) * scale).astype(jnp.bfloat16)   # fold 1/sqrt(hd)
    wk_h = to_heads(wqkv_f32[:, D:2 * D]).astype(jnp.bfloat16)
    wv_h = to_heads(wqkv_f32[:, 2 * D:]).astype(jnp.bfloat16)

    bqkv_f32 = bqkv.astype(jnp.float32).reshape(3 * D)
    bq_h = (bqkv_f32[:D] * scale).reshape(H, 1, hd)
    bk_h = bqkv_f32[D:2 * D].reshape(H, 1, hd)
    bv_h = bqkv_f32[2 * D:].reshape(H, 1, hd)

    wo_h = wo_t.astype(jnp.bfloat16).reshape(H, hd, D)                # per-head rows
    bo_f32 = bo.astype(jnp.float32).reshape(1, D)

    slopes = jnp.asarray(get_alibi_slopes(H), jnp.float32)            # (H,)  -> SMEM
    pos = jnp.arange(L)
    base = -jnp.abs(pos[None, :] - pos[:, None]).astype(jnp.float32)  # (L, L)

    grid = (grid_b, H)

    return pl.pallas_call(
        alibi_attn_head_kernel,
        out_shape=jax.ShapeDtypeStruct((B, L, D), x.dtype),
        grid=grid,
        in_specs=[
            pl.BlockSpec((batch_block, L, D), lambda b, h: (b, 0, 0)),   # x (constant over h)
            pl.BlockSpec((1, D, hd), lambda b, h: (h, 0, 0)),            # wq (per head)
            pl.BlockSpec((1, D, hd), lambda b, h: (h, 0, 0)),            # wk
            pl.BlockSpec((1, D, hd), lambda b, h: (h, 0, 0)),            # wv
            pl.BlockSpec((1, 1, hd), lambda b, h: (h, 0, 0)),            # bq
            pl.BlockSpec((1, 1, hd), lambda b, h: (h, 0, 0)),            # bk
            pl.BlockSpec((1, 1, hd), lambda b, h: (h, 0, 0)),            # bv
            pl.BlockSpec((1, hd, D), lambda b, h: (h, 0, 0)),            # wo rows (per head)
            pl.BlockSpec((1, D), lambda b, h: (0, 0)),                   # bo (constant)
            pl.BlockSpec(memory_space=pltpu.MemorySpace.SMEM),           # slopes (H,)
            pl.BlockSpec((L, L), lambda b, h: (0, 0)),                   # base (constant)
        ],
        out_specs=pl.BlockSpec((batch_block, L, D), lambda b, h: (b, 0, 0)),
        scratch_shapes=[pltpu.VMEM((batch_block * L, D), jnp.float32)],
        compiler_params=pltpu.CompilerParams(
            dimension_semantics=("parallel", "arbitrary"),
            vmem_limit_bytes=64 * 1024 * 1024,
        ),
    )(x, wq_h, wk_h, wv_h, bq_h, bk_h, bv_h, wo_h, bo_f32, slopes, base)


def alibi_attention_ref(x, wqkv_t, bqkv, wo_t, bo, n_heads):
    """Pure-JAX f32 reference mirroring the PyTorch forward."""
    B, L, D = x.shape
    hd = D // n_heads
    slopes = jnp.asarray(get_alibi_slopes(n_heads), jnp.float32).reshape(1, n_heads, 1, 1)

    qkv = x @ wqkv_t + bqkv[0]                           # (B, L, 3D)
    qkv = qkv.reshape(B, L, 3, n_heads, hd)
    q, k, v = qkv[:, :, 0], qkv[:, :, 1], qkv[:, :, 2]   # (B, L, H, hd)
    q = q.transpose(0, 2, 1, 3)
    k = k.transpose(0, 2, 1, 3)
    v = v.transpose(0, 2, 1, 3)

    scores = jnp.einsum("bhld,bhmd->bhlm", q, k) / math.sqrt(hd)
    pos = jnp.arange(L)
    rel = pos[None, :] - pos[:, None]
    bias = -jnp.abs(rel).astype(jnp.float32)[None, None]
    scores = scores + slopes * bias
    probs = jax.nn.softmax(scores, axis=-1)
    out = jnp.einsum("bhlm,bhmd->bhld", probs, v)
    out = out.transpose(0, 2, 1, 3).reshape(B, L, D)
    return out @ wo_t + bo[0]


if __name__ == "__main__":
    B, L, D, n_heads = 4, 8, 32, 4   # (B*T, L, D) with dim=32, 4 heads

    key = jax.random.PRNGKey(0)
    kx, k1, k2, k3, k4 = jax.random.split(key, 5)

    x = jax.random.normal(kx, (B, L, D), dtype=jnp.float32)
    # nn.Linear weights are (out, in) in torch; here we keep the transposed (in, out) form.
    wqkv_t = jax.random.normal(k1, (D, 3 * D), dtype=jnp.float32) * 0.05
    bqkv = jax.random.normal(k2, (1, 3 * D), dtype=jnp.float32) * 0.05
    wo_t = jax.random.normal(k3, (D, D), dtype=jnp.float32) * 0.05
    bo = jax.random.normal(k4, (1, D), dtype=jnp.float32) * 0.05

    out = alibi_attention(x, wqkv_t, bqkv, wo_t, bo, n_heads)
    out = jax.block_until_ready(out)

    ref = alibi_attention_ref(x, wqkv_t, bqkv, wo_t, bo, n_heads)
    assert out.shape == (B, L, D)
    # bf16 matmul operands + approx-reciprocal softmax -> bf16-level tolerance vs f32 reference.
    assert jnp.allclose(out, ref, atol=2e-2, rtol=2e-2), "mismatch vs reference"

    print("KERNEL_OK")
</pallas_src>

<mosaic_0001>
module attributes {stable_mosaic.version = 11 : i64} {
  func.func @alibi_attn_head_kernel(%arg0: i32, %arg1: i32, %arg2: memref<4x8x32xf32, #tpu.memory_space<vmem>>, %arg3: memref<1x32x8xbf16, #tpu.memory_space<vmem>>, %arg4: memref<1x32x8xbf16, #tpu.memory_space<vmem>>, %arg5: memref<1x32x8xbf16, #tpu.memory_space<vmem>>, %arg6: memref<1x1x8xf32, #tpu.memory_space<vmem>>, %arg7: memref<1x1x8xf32, #tpu.memory_space<vmem>>, %arg8: memref<1x1x8xf32, #tpu.memory_space<vmem>>, %arg9: memref<1x8x32xbf16, #tpu.memory_space<vmem>>, %arg10: memref<1x32xf32, #tpu.memory_space<vmem>>, %arg11: memref<4xf32, #tpu.memory_space<smem>>, %arg12: memref<8x8xf32, #tpu.memory_space<vmem>>, %arg13: memref<4x8x32xf32, #tpu.memory_space<vmem>>, %arg14: memref<32x32xf32, #tpu.memory_space<vmem>>) attributes {dimension_semantics = [#tpu.dimension_semantics<parallel>, #tpu.dimension_semantics<arbitrary>], iteration_bounds = array<i64: 1, 4>, scalar_prefetch = 0 : i64, scratch_operands = 1 : i64, tpu.core_type = #tpu.core_type<tc>, window_params = [{transform_indices = @transform_0, window_bounds = array<i64: 4, 8, 32>}, {transform_indices = @transform_1, window_bounds = array<i64: 1, 32, 8>}, {transform_indices = @transform_2, window_bounds = array<i64: 1, 32, 8>}, {transform_indices = @transform_3, window_bounds = array<i64: 1, 32, 8>}, {transform_indices = @transform_4, window_bounds = array<i64: 1, 1, 8>}, {transform_indices = @transform_5, window_bounds = array<i64: 1, 1, 8>}, {transform_indices = @transform_6, window_bounds = array<i64: 1, 1, 8>}, {transform_indices = @transform_7, window_bounds = array<i64: 1, 8, 32>}, {pipeline_mode = #tpu.pipeline_mode<synchronous>, transform_indices = @transform_8, window_bounds = array<i64: 1, 32>}, {transform_indices = @transform_9, window_bounds = array<i64: 4>}, {pipeline_mode = #tpu.pipeline_mode<synchronous>, transform_indices = @transform_10, window_bounds = array<i64: 8, 8>}, {transform_indices = @transform_11, window_bounds = array<i64: 4, 8, 32>}]} {
    %c0 = arith.constant 0 : index
    %c0_0 = arith.constant 0 : index
    %c0_1 = arith.constant 0 : index
    %0 = vector.load %arg2[%c0, %c0_0, %c0_1] : memref<4x8x32xf32, #tpu.memory_space<vmem>>, vector<4x8x32xf32>
    %1 = vector.shape_cast %0 : vector<4x8x32xf32> to vector<32x32xf32>
    %2 = arith.truncf %1 : vector<32x32xf32> to vector<32x32xbf16>
    %c0_2 = arith.constant 0 : index
    %c0_3 = arith.constant 0 : index
    %c0_4 = arith.constant 0 : index
    %3 = vector.load %arg3[%c0_2, %c0_3, %c0_4] : memref<1x32x8xbf16, #tpu.memory_space<vmem>>, vector<1x32x8xbf16>
    %4 = vector.shape_cast %3 : vector<1x32x8xbf16> to vector<32x8xbf16>
    %cst = arith.constant dense<0.000000e+00> : vector<32x8xf32>
    %5 = tpu.matmul %2, %4, %cst {dimension_numbers = #tpu.dot_dimension_numbers<[1], [0], [0], [1], [0, 0, 1, 1], [], []>} : vector<32x32xbf16>, vector<32x8xbf16>, vector<32x8xf32> -> vector<32x8xf32>
    %c0_5 = arith.constant 0 : index
    %c0_6 = arith.constant 0 : index
    %c0_7 = arith.constant 0 : index
    %6 = vector.load %arg6[%c0_5, %c0_6, %c0_7] : memref<1x1x8xf32, #tpu.memory_space<vmem>>, vector<1x1x8xf32>
    %7 = vector.shape_cast %6 : vector<1x1x8xf32> to vector<1x8xf32>
    %8 = vector.broadcast %7 : vector<1x8xf32> to vector<32x8xf32>
    %9 = arith.addf %5, %8 : vector<32x8xf32>
    %10 = vector.shape_cast %9 : vector<32x8xf32> to vector<4x8x8xf32>
    %11 = arith.truncf %10 : vector<4x8x8xf32> to vector<4x8x8xbf16>
    %c0_8 = arith.constant 0 : index
    %c0_9 = arith.constant 0 : index
    %c0_10 = arith.constant 0 : index
    %12 = vector.load %arg4[%c0_8, %c0_9, %c0_10] : memref<1x32x8xbf16, #tpu.memory_space<vmem>>, vector<1x32x8xbf16>
    %13 = vector.shape_cast %12 : vector<1x32x8xbf16> to vector<32x8xbf16>
    %cst_11 = arith.constant dense<0.000000e+00> : vector<32x8xf32>
    %14 = tpu.matmul %2, %13, %cst_11 {dimension_numbers = #tpu.dot_dimension_numbers<[1], [0], [0], [1], [0, 0, 1, 1], [], []>} : vector<32x32xbf16>, vector<32x8xbf16>, vector<32x8xf32> -> vector<32x8xf32>
    %c0_12 = arith.constant 0 : index
    %c0_13 = arith.constant 0 : index
    %c0_14 = arith.constant 0 : index
    %15 = vector.load %arg7[%c0_12, %c0_13, %c0_14] : memref<1x1x8xf32, #tpu.memory_space<vmem>>, vector<1x1x8xf32>
    %16 = vector.shape_cast %15 : vector<1x1x8xf32> to vector<1x8xf32>
    %17 = vector.broadcast %16 : vector<1x8xf32> to vector<32x8xf32>
    %18 = arith.addf %14, %17 : vector<32x8xf32>
    %19 = vector.shape_cast %18 : vector<32x8xf32> to vector<4x8x8xf32>
    %20 = arith.truncf %19 : vector<4x8x8xf32> to vector<4x8x8xbf16>
    %c0_15 = arith.constant 0 : index
    %c0_16 = arith.constant 0 : index
    %c0_17 = arith.constant 0 : index
    %21 = vector.load %arg5[%c0_15, %c0_16, %c0_17] : memref<1x32x8xbf16, #tpu.memory_space<vmem>>, vector<1x32x8xbf16>
    %22 = vector.shape_cast %21 : vector<1x32x8xbf16> to vector<32x8xbf16>
    %cst_18 = arith.constant dense<0.000000e+00> : vector<32x8xf32>
    %23 = tpu.matmul %2, %22, %cst_18 {dimension_numbers = #tpu.dot_dimension_numbers<[1], [0], [0], [1], [0, 0, 1, 1], [], []>} : vector<32x32xbf16>, vector<32x8xbf16>, vector<32x8xf32> -> vector<32x8xf32>
    %c0_19 = arith.constant 0 : index
    %c0_20 = arith.constant 0 : index
    %c0_21 = arith.constant 0 : index
    %24 = vector.load %arg8[%c0_19, %c0_20, %c0_21] : memref<1x1x8xf32, #tpu.memory_space<vmem>>, vector<1x1x8xf32>
    %25 = vector.shape_cast %24 : vector<1x1x8xf32> to vector<1x8xf32>
    %26 = vector.broadcast %25 : vector<1x8xf32> to vector<32x8xf32>
    %27 = arith.addf %23, %26 : vector<32x8xf32>
    %28 = vector.shape_cast %27 : vector<32x8xf32> to vector<4x8x8xf32>
    %29 = arith.truncf %28 : vector<4x8x8xf32> to vector<4x8x8xbf16>
    "tpu.trace_start"() <{level = 10 : i32, message = "bld,bmd->blm"}> : () -> ()
    %cst_22 = arith.constant dense<0.000000e+00> : vector<4x8x8xf32>
    %30 = tpu.matmul %11, %20, %cst_22 {dimension_numbers = #tpu.dot_dimension_numbers<[2], [2], [1], [1], [0, 0, 0, 1, 1, 1], [0], [0]>} : vector<4x8x8xbf16>, vector<4x8x8xbf16>, vector<4x8x8xf32> -> vector<4x8x8xf32>
    "tpu.trace_stop"() : () -> ()
    %31 = arith.index_cast %arg1 : i32 to index
    %32 = memref.load %arg11[%31] : memref<4xf32, #tpu.memory_space<smem>>
    %c0_23 = arith.constant 0 : index
    %c0_24 = arith.constant 0 : index
    %33 = vector.load %arg12[%c0_23, %c0_24] : memref<8x8xf32, #tpu.memory_space<vmem>>, vector<8x8xf32>
    %34 = vector.broadcast %32 : f32 to vector<8x8xf32>
    %35 = arith.mulf %34, %33 : vector<8x8xf32>
    %36 = vector.shape_cast %35 : vector<8x8xf32> to vector<1x8x8xf32>
    %37 = vector.broadcast %36 : vector<1x8x8xf32> to vector<4x8x8xf32>
    %38 = arith.addf %30, %37 : vector<4x8x8xf32>
    %cst_25 = arith.constant dense<0xFF800000> : vector<4x8xf32>
    %39 = vector.multi_reduction <maximumf>, %38, %cst_25 [2] : vector<4x8x8xf32> to vector<4x8xf32>
    %40 = vector.shape_cast %39 : vector<4x8xf32> to vector<4x8x1xf32>
    %41 = vector.broadcast %40 : vector<4x8x1xf32> to vector<4x8x8xf32>
    %42 = arith.subf %38, %41 : vector<4x8x8xf32>
    %43 = math.exp %42 : vector<4x8x8xf32>
    %cst_26 = arith.constant dense<0.000000e+00> : vector<4x8xf32>
    %44 = vector.multi_reduction <add>, %43, %cst_26 [2] : vector<4x8x8xf32> to vector<4x8xf32>
    %45 = vector.shape_cast %44 : vector<4x8xf32> to vector<4x8x1xf32>
    %46 = tpu.reciprocal %45 {approx = true} : vector<4x8x1xf32> -> vector<4x8x1xf32>
    %47 = vector.broadcast %46 : vector<4x8x1xf32> to vector<4x8x8xf32>
    %48 = arith.mulf %43, %47 : vector<4x8x8xf32>
    %49 = arith.truncf %48 : vector<4x8x8xf32> to vector<4x8x8xbf16>
    "tpu.trace_start"() <{level = 10 : i32, message = "blm,bmd->bld"}> : () -> ()
    %cst_27 = arith.constant dense<0.000000e+00> : vector<4x8x8xf32>
    %50 = tpu.matmul %49, %29, %cst_27 {dimension_numbers = #tpu.dot_dimension_numbers<[2], [1], [1], [2], [0, 0, 0, 1, 1, 2], [0], [0]>} : vector<4x8x8xbf16>, vector<4x8x8xbf16>, vector<4x8x8xf32> -> vector<4x8x8xf32>
    "tpu.trace_stop"() : () -> ()
    %51 = vector.shape_cast %50 : vector<4x8x8xf32> to vector<32x8xf32>
    %52 = arith.truncf %51 : vector<32x8xf32> to vector<32x8xbf16>
    %c0_i32 = arith.constant 0 : i32
    %53 = arith.cmpi eq, %arg1, %c0_i32 : i32
    %54 = arith.extui %53 : i1 to i32
    %c0_i32_28 = arith.constant 0 : i32
    %55 = arith.cmpi ne, %54, %c0_i32_28 : i32
    scf.if %55 {
      %cst_38 = arith.constant 0.000000e+00 : f32
      %65 = vector.broadcast %cst_38 : f32 to vector<32x32xf32>
      %c0_39 = arith.constant 0 : index
      %c0_40 = arith.constant 0 : index
      %66 = vector.load %arg14[%c0_39, %c0_40] : memref<32x32xf32, #tpu.memory_space<vmem>>, vector<32x32xf32>
      tpu.vector_store %arg14[%c0_39, %c0_40], %65 {strides = array<i32>} : memref<32x32xf32, #tpu.memory_space<vmem>>, vector<32x32xf32>,
    } else {
    }
    %c0_29 = arith.constant 0 : index
    %c0_30 = arith.constant 0 : index
    %56 = vector.load %arg14[%c0_29, %c0_30] : memref<32x32xf32, #tpu.memory_space<vmem>>, vector<32x32xf32>
    %c0_31 = arith.constant 0 : index
    %c0_32 = arith.constant 0 : index
    %c0_33 = arith.constant 0 : index
    %57 = vector.load %arg9[%c0_31, %c0_32, %c0_33] : memref<1x8x32xbf16, #tpu.memory_space<vmem>>, vector<1x8x32xbf16>
    %58 = vector.shape_cast %57 : vector<1x8x32xbf16> to vector<8x32xbf16>
    %cst_34 = arith.constant dense<0.000000e+00> : vector<32x32xf32>
    %59 = tpu.matmul %52, %58, %cst_34 {dimension_numbers = #tpu.dot_dimension_numbers<[1], [0], [0], [1], [0, 0, 1, 1], [], []>} : vector<32x8xbf16>, vector<8x32xbf16>, vector<32x32xf32> -> vector<32x32xf32>
    %60 = arith.addf %56, %59 : vector<32x32xf32>
    %c0_35 = arith.constant 0 : index
    %c0_36 = arith.constant 0 : index
    %61 = vector.load %arg14[%c0_35, %c0_36] : memref<32x32xf32, #tpu.memory_space<vmem>>, vector<32x32xf32>
    tpu.vector_store %arg14[%c0_35, %c0_36], %60 {strides = array<i32>} : memref<32x32xf32, #tpu.memory_space<vmem>>, vector<32x32xf32>,
    %c3_i32 = arith.constant 3 : i32
    %62 = arith.cmpi eq, %arg1, %c3_i32 : i32
    %63 = arith.extui %62 : i1 to i32
    %c0_i32_37 = arith.constant 0 : i32
    %64 = arith.cmpi ne, %63, %c0_i32_37 : i32
    scf.if %64 {
      %c0_38 = arith.constant 0 : index
      %c0_39 = arith.constant 0 : index
      %65 = vector.load %arg14[%c0_38, %c0_39] : memref<32x32xf32, #tpu.memory_space<vmem>>, vector<32x32xf32>
      %c0_40 = arith.constant 0 : index
      %c0_41 = arith.constant 0 : index
      %66 = vector.load %arg10[%c0_40, %c0_41] : memref<1x32xf32, #tpu.memory_space<vmem>>, vector<1x32xf32>
      %67 = vector.broadcast %66 : vector<1x32xf32> to vector<32x32xf32>
      %68 = arith.addf %65, %67 : vector<32x32xf32>
      %69 = vector.shape_cast %68 : vector<32x32xf32> to vector<4x8x32xf32>
      %c0_42 = arith.constant 0 : index
      %c0_43 = arith.constant 0 : index
      %c0_44 = arith.constant 0 : index
      %70 = vector.load %arg13[%c0_42, %c0_43, %c0_44] : memref<4x8x32xf32, #tpu.memory_space<vmem>>, vector<4x8x32xf32>
      tpu.vector_store %arg13[%c0_42, %c0_43, %c0_44], %69 {strides = array<i32>} : memref<4x8x32xf32, #tpu.memory_space<vmem>>, vector<4x8x32xf32>,
    } else {
    }
    return
  }
  func.func @transform_0(%arg0: i32, %arg1: i32) -> (i32, i32, i32) {
    %c0_i32 = arith.constant 0 : i32
    %c0_i32_0 = arith.constant 0 : i32
    %c0_i32_1 = arith.constant 0 : i32
    return %arg0, %c0_i32, %c0_i32_0 : i32, i32, i32
  }
  func.func @transform_1(%arg0: i32, %arg1: i32) -> (i32, i32, i32) {
    %c0_i32 = arith.constant 0 : i32
    %c0_i32_0 = arith.constant 0 : i32
    %c0_i32_1 = arith.constant 0 : i32
    return %arg1, %c0_i32, %c0_i32_0 : i32, i32, i32
  }
  func.func @transform_2(%arg0: i32, %arg1: i32) -> (i32, i32, i32) {
    %c0_i32 = arith.constant 0 : i32
    %c0_i32_0 = arith.constant 0 : i32
    %c0_i32_1 = arith.constant 0 : i32
    return %arg1, %c0_i32, %c0_i32_0 : i32, i32, i32
  }
  func.func @transform_3(%arg0: i32, %arg1: i32) -> (i32, i32, i32) {
    %c0_i32 = arith.constant 0 : i32
    %c0_i32_0 = arith.constant 0 : i32
    %c0_i32_1 = arith.constant 0 : i32
    return %arg1, %c0_i32, %c0_i32_0 : i32, i32, i32
  }
  func.func @transform_4(%arg0: i32, %arg1: i32) -> (i32, i32, i32) {
    %c0_i32 = arith.constant 0 : i32
    %c0_i32_0 = arith.constant 0 : i32
    %c0_i32_1 = arith.constant 0 : i32
    return %arg1, %c0_i32, %c0_i32_0 : i32, i32, i32
  }
  func.func @transform_5(%arg0: i32, %arg1: i32) -> (i32, i32, i32) {
    %c0_i32 = arith.constant 0 : i32
    %c0_i32_0 = arith.constant 0 : i32
    %c0_i32_1 = arith.constant 0 : i32
    return %arg1, %c0_i32, %c0_i32_0 : i32, i32, i32
  }
  func.func @transform_6(%arg0: i32, %arg1: i32) -> (i32, i32, i32) {
    %c0_i32 = arith.constant 0 : i32
    %c0_i32_0 = arith.constant 0 : i32
    %c0_i32_1 = arith.constant 0 : i32
    return %arg1, %c0_i32, %c0_i32_0 : i32, i32, i32
  }
  func.func @transform_7(%arg0: i32, %arg1: i32) -> (i32, i32, i32) {
    %c0_i32 = arith.constant 0 : i32
    %c0_i32_0 = arith.constant 0 : i32
    %c0_i32_1 = arith.constant 0 : i32
    return %arg1, %c0_i32, %c0_i32_0 : i32, i32, i32
  }
  func.func @transform_8(%arg0: i32, %arg1: i32) -> (i32, i32) {
    %c0_i32 = arith.constant 0 : i32
    %c0_i32_0 = arith.constant 0 : i32
    %c0_i32_1 = arith.constant 0 : i32
    return %c0_i32, %c0_i32_0 : i32, i32
  }
  func.func @transform_9(%arg0: i32, %arg1: i32) -> i32 {
    %c0_i32 = arith.constant 0 : i32
    %c0_i32_0 = arith.constant 0 : i32
    return %c0_i32 : i32
  }
  func.func @transform_10(%arg0: i32, %arg1: i32) -> (i32, i32) {
    %c0_i32 = arith.constant 0 : i32
    %c0_i32_0 = arith.constant 0 : i32
    %c0_i32_1 = arith.constant 0 : i32
    return %c0_i32, %c0_i32_0 : i32, i32
  }
  func.func @transform_11(%arg0: i32, %arg1: i32) -> (i32, i32, i32) {
    %c0_i32 = arith.constant 0 : i32
    %c0_i32_0 = arith.constant 0 : i32
    %c0_i32_1 = arith.constant 0 : i32
    return %arg0, %c0_i32, %c0_i32_0 : i32, i32, i32
  }
}

</mosaic_0001>

<llo_original>
// kernel: tpu_custom_call.1
$region0: #{tpu_custom_call.1}
  #allocation0 [shape = 'u32[]', space=smem, size = 0x4, offset = 0x4, fixed_abs, tag = 'smem constant byte address 0x4 - core index']
  #allocation1 [shape = 'u32[72,128]{1,0:T(1,128)}', space=vmem, size = 0x9000, scoped, tag = 'internal scratch']
  #allocation2 [shape = 'f32[32,32]{1,0:T(8,128)}', space=vmem, size = 0x4000, scoped, tag = 'scratch operand']
  %s0 = inlined_call_operand.vmem [shape: f32[4,8,32], index: 0, kind: input, shape index: {}]
  %s1 = inlined_call_operand.vmem [shape: bf16[4,32,8], index: 1, kind: input, shape index: {}]
  %s2 = inlined_call_operand.vmem [shape: bf16[4,32,8], index: 2, kind: input, shape index: {}]
  %s3 = inlined_call_operand.vmem [shape: bf16[4,32,8], index: 3, kind: input, shape index: {}]
  %s4 = inlined_call_operand.vmem [shape: f32[4,1,8], index: 4, kind: input, shape index: {}]
  %s5 = inlined_call_operand.vmem [shape: f32[4,1,8], index: 5, kind: input, shape index: {}]
  %s6 = inlined_call_operand.vmem [shape: f32[4,1,8], index: 6, kind: input, shape index: {}]
  %s7 = inlined_call_operand.vmem [shape: bf16[4,8,32], index: 7, kind: input, shape index: {}]
  %s8 = inlined_call_operand.vmem [shape: f32[1,32], index: 8, kind: input, shape index: {}]
  %s9 = inlined_call_operand.vmem [shape: f32[4], index: 9, kind: input, shape index: {}]
  %s10 = inlined_call_operand.vmem [shape: f32[8,8], index: 10, kind: input, shape index: {}]
  %s11 = inlined_call_operand.hbm [shape: f32[4,8,32], index: 11, kind: output, shape index: {}]
  %s12 = sld [smem:[#allocation0]]
  $region89: #{tpu_custom_call.1} parent=0
    _
  %s14 = ssub.s32 1, %s12
  %s15 = scalar_select 0, %s14, %s12
  $region1: #{tpu_custom_call.1} parent=0
    #allocation3 [shape = 'u8[512]{0}', space=smem, size = 0x200, scoped, tag = 'input window, operand 9, single buffered']
    #allocation4 [shape = 's32[2]{0}', space=sflag, size = 0x8, scoped, tag = 'scoped memory for tpu_custom_call.1']
    #allocation5 [shape = 's32[2]{0}', space=sflag, size = 0x8, scoped, tag = 'scoped memory for tpu_custom_call.1']
    #allocation6 [shape = 'u8[16384]{0}', space=vmem, size = 0x4000, scoped, tag = 'output window, operand 0, single buffered']
    %16 = vsyncpa [#allocation5], 0
    %17 = vsyncpa [#allocation4], 0
    loop: start=0, step=1, limit=6
    $region2: #{tpu_custom_call.1} parent=1 // loop_pre_header
      _
    $region3: #{tpu_custom_call.1} parent=1 // loop_header
      %s19 = sphi 0, %s23
      %p20 = scmp.ge.s32.totalorder %s19, 6
      %s26 = sphi 0, %s38
      %s27 = sphi 0, %s34
      %s28 = sphi 0, %s26
      %s29 = sphi 0, %s27
      %s30 = sphi 0, %s28
      %s31 = sphi 0, %s29
      %s41 = sphi 0, %s43
      %s44 = sphi 0, %s41
      %s45 = sphi 0, %s44
      %s61 = sphi 0, %s45
      %s67 = sphi 0, %s69
      %s70 = sphi 0, %s67
      %s71 = sphi 0, %s70
      %s87 = sphi 0, %s71
      %s93 = sphi 0, %s95
      %s96 = sphi 0, %s93
      %s97 = sphi 0, %s96
      %s113 = sphi 0, %s97
      %s119 = sphi 0, %s121
      %s122 = sphi 0, %s119
      %s123 = sphi 0, %s122
      %s139 = sphi 0, %s123
      %s145 = sphi 0, %s147
      %s148 = sphi 0, %s145
      %s149 = sphi 0, %s148
      %s165 = sphi 0, %s149
      %s171 = sphi 0, %s173
      %s174 = sphi 0, %s171
      %s175 = sphi 0, %s174
      %s191 = sphi 0, %s175
      %s197 = sphi 0, %s199
      %s200 = sphi 0, %s197
      %s201 = sphi 0, %s200
      %s217 = sphi 0, %s201
      %s223 = sphi 0, %s225
      %s226 = sphi 0, %s223
      %s227 = sphi 0, %s226
      %s243 = sphi 0, %s227
      %s247 = sphi 0, %s247
      %s249 = sphi 0, %s247
      %s250 = sphi 0, %s249
      %s264 = sphi 0, %s250
      %s268 = sphi 0, %s268
      %s270 = sphi 0, %s268
      %s271 = sphi 0, %s270
      %s285 = sphi 0, %s271
      %s289 = sphi 0, %s289
      %s291 = sphi 0, %s289
      %s292 = sphi 0, %s291
      %s306 = sphi 0, %s292
      %s312 = sphi 0, %s314
      %s315 = sphi 0, %s312
      %s316 = sphi 0, %s315
      %s332 = sphi 0, %s316
    $region4: #{tpu_custom_call.1} parent=1 // loop_header_branch
      %22 = sbr.rel (%p20) target = $region8
    $region5: #{tpu_custom_call.1} parent=1 // loop_body
      %s24 = ssub.s32 %s19, 1
      %s25 = ssub.s32 %s19, 2
      %s32 = sadd.s32 1, %s27
      %p33 = scmp.ge.s32.totalorder %s32, 4
      %s34 = scalar_select %p33, 0, %s32
      %s35 = sadd.s32 1, %s26
      %s36 = scalar_select %p33, %s35, %s26
      %p37 = scmp.ge.s32.totalorder %s36, 1
      %s38 = scalar_select %p37, 0, %s36
      %s39 = ssub.s32 %s26, %s38
      %p40 = scmp.eq.s32.totalorder %s39, 0
      %s42 = sadd.s32 %s41, 1
      %s43 = scalar_select %p40, %s41, %s42
      %p46 = pneg %p40
      %p47 = scmp.eq.s32.totalorder %s19, 3
      %p48 = por %p46, %p47
      %p49 = scmp.ne.s32.totalorder %s41, %s44
      %p50 = scmp.eq.s32.totalorder %s19, 0
      %p51 = por %p49, %p50
      %p52 = scmp.ne.s32.totalorder %s41, %s44
      %p53 = scmp.eq.s32.totalorder %s24, 3
      %p54 = por %p52, %p53
      %p55 = scmp.ne.s32.totalorder %s44, %s45
      %p56 = scmp.eq.s32.totalorder %s24, 0
      %p57 = por %p55, %p56
      %p58 = scmp.ne.s32.totalorder %s44, %s45
      %p59 = scmp.eq.s32.totalorder %s25, 3
      %p60 = por %p58, %p59
      %p62 = scmp.ne.s32.totalorder %s45, %s61
      %p63 = scmp.eq.s32.totalorder %s25, 0
      %p64 = por %p62, %p63
      %s65 = ssub.s32 %s27, %s34
      %p66 = scmp.eq.s32.totalorder %s65, 0
      %s68 = sadd.s32 %s67, 1
      %s69 = scalar_select %p66, %s67, %s68
      %p72 = pneg %p66
      %p73 = scmp.eq.s32.totalorder %s19, 3
      %p74 = por %p72, %p73
      %p75 = scmp.ne.s32.totalorder %s67, %s70
      %p76 = scmp.eq.s32.totalorder %s19, 0
      %p77 = por %p75, %p76
      %p78 = scmp.ne.s32.totalorder %s67, %s70
      %p79 = scmp.eq.s32.totalorder %s24, 3
      %p80 = por %p78, %p79
      %p81 = scmp.ne.s32.totalorder %s70, %s71
      %p82 = scmp.eq.s32.totalorder %s24, 0
      %p83 = por %p81, %p82
      %p84 = scmp.ne.s32.totalorder %s70, %s71
      %p85 = scmp.eq.s32.totalorder %s25, 3
      %p86 = por %p84, %p85
      %p88 = scmp.ne.s32.totalorder %s71, %s87
      %p89 = scmp.eq.s32.totalorder %s25, 0
      %p90 = por %p88, %p89
      %s91 = ssub.s32 %s27, %s34
      %p92 = scmp.eq.s32.totalorder %s91, 0
      %s94 = sadd.s32 %s93, 1
      %s95 = scalar_select %p92, %s93, %s94
      %p98 = pneg %p92
      %p99 = scmp.eq.s32.totalorder %s19, 3
      %p100 = por %p98, %p99
      %p101 = scmp.ne.s32.totalorder %s93, %s96
      %p102 = scmp.eq.s32.totalorder %s19, 0
      %p103 = por %p101, %p102
      %p104 = scmp.ne.s32.totalorder %s93, %s96
      %p105 = scmp.eq.s32.totalorder %s24, 3
      %p106 = por %p104, %p105
      %p107 = scmp.ne.s32.totalorder %s96, %s97
      %p108 = scmp.eq.s32.totalorder %s24, 0
      %p109 = por %p107, %p108
      %p110 = scmp.ne.s32.totalorder %s96, %s97
      %p111 = scmp.eq.s32.totalorder %s25, 3
      %p112 = por %p110, %p111
      %p114 = scmp.ne.s32.totalorder %s97, %s113
      %p115 = scmp.eq.s32.totalorder %s25, 0
      %p116 = por %p114, %p115
      %s117 = ssub.s32 %s27, %s34
      %p118 = scmp.eq.s32.totalorder %s117, 0
      %s120 = sadd.s32 %s119, 1
      %s121 = scalar_select %p118, %s119, %s120
      %p124 = pneg %p118
      %p125 = scmp.eq.s32.totalorder %s19, 3
      %p126 = por %p124, %p125
      %p127 = scmp.ne.s32.totalorder %s119, %s122
      %p128 = scmp.eq.s32.totalorder %s19, 0
      %p129 = por %p127, %p128
      %p130 = scmp.ne.s32.totalorder %s119, %s122
      %p131 = scmp.eq.s32.totalorder %s24, 3
      %p132 = por %p130, %p131
      %p133 = scmp.ne.s32.totalorder %s122, %s123
      %p134 = scmp.eq.s32.totalorder %s24, 0
      %p135 = por %p133, %p134
      %p136 = scmp.ne.s32.totalorder %s122, %s123
      %p137 = scmp.eq.s32.totalorder %s25, 3
      %p138 = por %p136, %p137
      %p140 = scmp.ne.s32.totalorder %s123, %s139
      %p141 = scmp.eq.s32.totalorder %s25, 0
      %p142 = por %p140, %p141
      %s143 = ssub.s32 %s27, %s34
      %p144 = scmp.eq.s32.totalorder %s143, 0
      %s146 = sadd.s32 %s145, 1
      %s147 = scalar_select %p144, %s145, %s146
      %p150 = pneg %p144
      %p151 = scmp.eq.s32.totalorder %s19, 3
      %p152 = por %p150, %p151
      %p153 = scmp.ne.s32.totalorder %s145, %s148
      %p154 = scmp.eq.s32.totalorder %s19, 0
      %p155 = por %p153, %p154
      %p156 = scmp.ne.s32.totalorder %s145, %s148
      %p157 = scmp.eq.s32.totalorder %s24, 3
      %p158 = por %p156, %p157
      %p159 = scmp.ne.s32.totalorder %s148, %s149
      %p160 = scmp.eq.s32.totalorder %s24, 0
      %p161 = por %p159, %p160
      %p162 = scmp.ne.s32.totalorder %s148, %s149
      %p163 = scmp.eq.s32.totalorder %s25, 3
      %p164 = por %p162, %p163
      %p166 = scmp.ne.s32.totalorder %s149, %s165
      %p167 = scmp.eq.s32.totalorder %s25, 0
      %p168 = por %p166, %p167
      %s169 = ssub.s32 %s27, %s34
      %p170 = scmp.eq.s32.totalorder %s169, 0
      %s172 = sadd.s32 %s171, 1
      %s173 = scalar_select %p170, %s171, %s172
      %p176 = pneg %p170
      %p177 = scmp.eq.s32.totalorder %s19, 3
      %p178 = por %p176, %p177
      %p179 = scmp.ne.s32.totalorder %s171, %s174
      %p180 = scmp.eq.s32.totalorder %s19, 0
      %p181 = por %p179, %p180
      %p182 = scmp.ne.s32.totalorder %s171, %s174
      %p183 = scmp.eq.s32.totalorder %s24, 3
      %p184 = por %p182, %p183
      %p185 = scmp.ne.s32.totalorder %s174, %s175
      %p186 = scmp.eq.s32.totalorder %s24, 0
      %p187 = por %p185, %p186
      %p188 = scmp.ne.s32.totalorder %s174, %s175
      %p189 = scmp.eq.s32.totalorder %s25, 3
      %p190 = por %p188, %p189
      %p192 = scmp.ne.s32.totalorder %s175, %s191
      %p193 = scmp.eq.s32.totalorder %s25, 0
      %p194 = por %p192, %p193
      %s195 = ssub.s32 %s27, %s34
      %p196 = scmp.eq.s32.totalorder %s195, 0
      %s198 = sadd.s32 %s197, 1
      %s199 = scalar_select %p196, %s197, %s198
      %p202 = pneg %p196
      %p203 = scmp.eq.s32.totalorder %s19, 3
      %p204 = por %p202, %p203
      %p205 = scmp.ne.s32.totalorder %s197, %s200
      %p206 = scmp.eq.s32.totalorder %s19, 0
      %p207 = por %p205, %p206
      %p208 = scmp.ne.s32.totalorder %s197, %s200
      %p209 = scmp.eq.s32.totalorder %s24, 3
      %p210 = por %p208, %p209
      %p211 = scmp.ne.s32.totalorder %s200, %s201
      %p212 = scmp.eq.s32.totalorder %s24, 0
      %p213 = por %p211, %p212
      %p214 = scmp.ne.s32.totalorder %s200, %s201
      %p215 = scmp.eq.s32.totalorder %s25, 3
      %p216 = por %p214, %p215
      %p218 = scmp.ne.s32.totalorder %s201, %s217
      %p219 = scmp.eq.s32.totalorder %s25, 0
      %p220 = por %p218, %p219
      %s221 = ssub.s32 %s27, %s34
      %p222 = scmp.eq.s32.totalorder %s221, 0
      %s224 = sadd.s32 %s223, 1
      %s225 = scalar_select %p222, %s223, %s224
      %p228 = pneg %p222
      %p229 = scmp.eq.s32.totalorder %s19, 3
      %p230 = por %p228, %p229
      %p231 = scmp.ne.s32.totalorder %s223, %s226
      %p232 = scmp.eq.s32.totalorder %s19, 0
      %p233 = por %p231, %p232
      %p234 = scmp.ne.s32.totalorder %s223, %s226
      %p235 = scmp.eq.s32.totalorder %s24, 3
      %p236 = por %p234, %p235
      %p237 = scmp.ne.s32.totalorder %s226, %s227
      %p238 = scmp.eq.s32.totalorder %s24, 0
      %p239 = por %p237, %p238
      %p240 = scmp.ne.s32.totalorder %s226, %s227
      %p241 = scmp.eq.s32.totalorder %s25, 3
      %p242 = por %p240, %p241
      %p244 = scmp.ne.s32.totalorder %s227, %s243
      %p245 = scmp.eq.s32.totalorder %s25, 0
      %p246 = por %p244, %p245
      %s248 = sadd.s32 %s247, 1
      %p251 = scmp.eq.s32.totalorder %s19, 3
      %p252 = scmp.ne.s32.totalorder %s247, %s249
      %p253 = scmp.eq.s32.totalorder %s19, 0
      %p254 = por %p252, %p253
      %p255 = scmp.ne.s32.totalorder %s247, %s249
      %p256 = scmp.eq.s32.totalorder %s24, 3
      %p257 = por %p255, %p256
      %p258 = scmp.ne.s32.totalorder %s249, %s250
      %p259 = scmp.eq.s32.totalorder %s24, 0
      %p260 = por %p258, %p259
      %p261 = scmp.ne.s32.totalorder %s249, %s250
      %p262 = scmp.eq.s32.totalorder %s25, 3
      %p263 = por %p261, %p262
      %p265 = scmp.ne.s32.totalorder %s250, %s264
      %p266 = scmp.eq.s32.totalorder %s25, 0
      %p267 = por %p265, %p266
      %s269 = sadd.s32 %s268, 1
      %p272 = scmp.eq.s32.totalorder %s19, 3
      %p273 = scmp.ne.s32.totalorder %s268, %s270
      %p274 = scmp.eq.s32.totalorder %s19, 0
      %p275 = por %p273, %p274
      %p276 = scmp.ne.s32.totalorder %s268, %s270
      %p277 = scmp.eq.s32.totalorder %s24, 3
      %p278 = por %p276, %p277
      %p279 = scmp.ne.s32.totalorder %s270, %s271
      %p280 = scmp.eq.s32.totalorder %s24, 0
      %p281 = por %p279, %p280
      %p282 = scmp.ne.s32.totalorder %s270, %s271
      %p283 = scmp.eq.s32.totalorder %s25, 3
      %p284 = por %p282, %p283
      %p286 = scmp.ne.s32.totalorder %s271, %s285
      %p287 = scmp.eq.s32.totalorder %s25, 0
      %p288 = por %p286, %p287
      %s290 = sadd.s32 %s289, 1
      %p293 = scmp.eq.s32.totalorder %s19, 3
      %p294 = scmp.ne.s32.totalorder %s289, %s291
      %p295 = scmp.eq.s32.totalorder %s19, 0
      %p296 = por %p294, %p295
      %p297 = scmp.ne.s32.totalorder %s289, %s291
      %p298 = scmp.eq.s32.totalorder %s24, 3
      %p299 = por %p297, %p298
      %p300 = scmp.ne.s32.totalorder %s291, %s292
      %p301 = scmp.eq.s32.totalorder %s24, 0
      %p302 = por %p300, %p301
      %p303 = scmp.ne.s32.totalorder %s291, %s292
      %p304 = scmp.eq.s32.totalorder %s25, 3
      %p305 = por %p303, %p304
      %p307 = scmp.ne.s32.totalorder %s292, %s306
      %p308 = scmp.eq.s32.totalorder %s25, 0
      %p309 = por %p307, %p308
      %s310 = ssub.s32 %s26, %s38
      %p311 = scmp.eq.s32.totalorder %s310, 0
      %s313 = sadd.s32 %s312, 1
      %s314 = scalar_select %p311, %s312, %s313
      %p317 = pneg %p311
      %p318 = scmp.eq.s32.totalorder %s19, 3
      %p319 = por %p317, %p318
      %p320 = scmp.ne.s32.totalorder %s312, %s315
      %p321 = scmp.eq.s32.totalorder %s19, 0
      %p322 = por %p320, %p321
      %p323 = scmp.ne.s32.totalorder %s312, %s315
      %p324 = scmp.eq.s32.totalorder %s24, 3
      %p325 = por %p323, %p324
      %p326 = scmp.ne.s32.totalorder %s315, %s316
      %p327 = scmp.eq.s32.totalorder %s24, 0
      %p328 = por %p326, %p327
      %p329 = scmp.ne.s32.totalorder %s315, %s316
      %p330 = scmp.eq.s32.totalorder %s25, 3
      %p331 = por %p329, %p330
      %p333 = scmp.ne.s32.totalorder %s316, %s332
      %p334 = scmp.eq.s32.totalorder %s25, 0
      %p335 = por %p333, %p334
      %p336 = scmp.le.s32.totalorder 1, %s19
      %p337 = scmp.lt.s32.totalorder %s19, 5
      %p338 = pnand %p336, %p337
      %p339 = pneg %p338
      // Predicated region
      $region9: #{tpu_custom_call.1} parent=5 // pred_check
        _
      $region10: #{tpu_custom_call.1} parent=5 // pred_check_branch
        %341 = sbr.rel (%p338) target = $region12
      $region11: #{tpu_custom_call.1} parent=5 // pred_region
        %s342 = ssub.s32 %s19, 1
        // Predicated region
        $region13: #{tpu_custom_call.1} parent=11 // pred_check
          %p343 = pneg %p57
        $region14: #{tpu_custom_call.1} parent=11 // pred_check_branch
          %345 = sbr.rel (%p343) target = $region16
        $region15: #{tpu_custom_call.1} parent=11 // pred_region
          %s346 = smul.u32 4, %s28
          %p347 = scmp.lt.s32.totalorder %s346, 3
          %s348 = scalar_select %p347, %s346, 3
          %s349 = smul.addr %s348, 8
          %s350 = scalar_lea.vmem %s0, %s349
          %s351 = smul.u32 4, %s28
        $region16: #{tpu_custom_call.1} parent=11 // pred_fallthru
          _
        // Predicated region
        $region17: #{tpu_custom_call.1} parent=11 // pred_check
          %p352 = pneg %p260
        $region18: #{tpu_custom_call.1} parent=11 // pred_check_branch
          %354 = sbr.rel (%p352) target = $region20
        $region19: #{tpu_custom_call.1} parent=11 // pred_region
          _
        $region20: #{tpu_custom_call.1} parent=11 // pred_fallthru
          _
        // Predicated region
        $region21: #{tpu_custom_call.1} parent=11 // pred_check
          %p355 = pneg %p281
        $region22: #{tpu_custom_call.1} parent=11 // pred_check_branch
          %357 = sbr.rel (%p355) target = $region24
        $region23: #{tpu_custom_call.1} parent=11 // pred_region
          %359 = vsyncadd [#allocation5], 0
          %s361 = sshll.u32 %s9, 4
          %s362 = int_to_ptr.vmem [resolvable:$true] %s361
          %364 = dma.vmem_to_smem %s362, 16, [#allocation3], [#allocation5]
        $region24: #{tpu_custom_call.1} parent=11 // pred_fallthru
          _
        // Predicated region
        $region25: #{tpu_custom_call.1} parent=11 // pred_check
          %p365 = pneg %p302
        $region26: #{tpu_custom_call.1} parent=11 // pred_check_branch
          %367 = sbr.rel (%p365) target = $region28
        $region27: #{tpu_custom_call.1} parent=11 // pred_region
          _
        $region28: #{tpu_custom_call.1} parent=11 // pred_fallthru
          _
      $region12: #{tpu_custom_call.1} parent=5 // pred_fallthru
        _
      %p368 = scmp.lt.s32.totalorder %s19, 4
      // Predicated region
      $region29: #{tpu_custom_call.1} parent=5 // pred_check
        %p369 = pneg %p368
      $region30: #{tpu_custom_call.1} parent=5 // pred_check_branch
        %371 = sbr.rel (%p369) target = $region32
      $region31: #{tpu_custom_call.1} parent=5 // pred_region
        // Predicated region
        $region33: #{tpu_custom_call.1} parent=31 // pred_check
          %p372 = pneg %p77
        $region34: #{tpu_custom_call.1} parent=31 // pred_check_branch
          %374 = sbr.rel (%p372) target = $region36
        $region35: #{tpu_custom_call.1} parent=31 // pred_region
          %p375 = scmp.lt.s32.totalorder %s27, 3
          %s376 = scalar_select %p375, %s27, 3
          %s377 = smul.addr %s376, 4
          %s378 = smul.addr %s377, 4
          %s379 = scalar_lea.vmem %s1, %s378
        $region36: #{tpu_custom_call.1} parent=31 // pred_fallthru
          _
        // Predicated region
        $region37: #{tpu_custom_call.1} parent=31 // pred_check
          %p380 = pneg %p103
        $region38: #{tpu_custom_call.1} parent=31 // pred_check_branch
          %382 = sbr.rel (%p380) target = $region40
        $region39: #{tpu_custom_call.1} parent=31 // pred_region
          %p383 = scmp.lt.s32.totalorder %s27, 3
          %s384 = scalar_select %p383, %s27, 3
          %s385 = smul.addr %s384, 4
          %s386 = smul.addr %s385, 4
          %s387 = scalar_lea.vmem %s2, %s386
        $region40: #{tpu_custom_call.1} parent=31 // pred_fallthru
          _
        // Predicated region
        $region41: #{tpu_custom_call.1} parent=31 // pred_check
          %p388 = pneg %p129
        $region42: #{tpu_custom_call.1} parent=31 // pred_check_branch
          %390 = sbr.rel (%p388) target = $region44
        $region43: #{tpu_custom_call.1} parent=31 // pred_region
          %p391 = scmp.lt.s32.totalorder %s27, 3
          %s392 = scalar_select %p391, %s27, 3
          %s393 = smul.addr %s392, 4
          %s394 = smul.addr %s393, 4
          %s395 = scalar_lea.vmem %s3, %s394
        $region44: #{tpu_custom_call.1} parent=31 // pred_fallthru
          _
        // Predicated region
        $region45: #{tpu_custom_call.1} parent=31 // pred_check
          %p396 = pneg %p155
        $region46: #{tpu_custom_call.1} parent=31 // pred_check_branch
          %398 = sbr.rel (%p396) target = $region48
        $region47: #{tpu_custom_call.1} parent=31 // pred_region
          %p399 = scmp.lt.s32.totalorder %s27, 3
          %s400 = scalar_select %p399, %s27, 3
          %s401 = scalar_lea.vmem %s4, %s400
        $region48: #{tpu_custom_call.1} parent=31 // pred_fallthru
          _
        // Predicated region
        $region49: #{tpu_custom_call.1} parent=31 // pred_check
          %p402 = pneg %p181
        $region50: #{tpu_custom_call.1} parent=31 // pred_check_branch
          %404 = sbr.rel (%p402) target = $region52
        $region51: #{tpu_custom_call.1} parent=31 // pred_region
          %p405 = scmp.lt.s32.totalorder %s27, 3
          %s406 = scalar_select %p405, %s27, 3
          %s407 = scalar_lea.vmem %s5, %s406
        $region52: #{tpu_custom_call.1} parent=31 // pred_fallthru
          _
        // Predicated region
        $region53: #{tpu_custom_call.1} parent=31 // pred_check
          %p408 = pneg %p207
        $region54: #{tpu_custom_call.1} parent=31 // pred_check_branch
          %410 = sbr.rel (%p408) target = $region56
        $region55: #{tpu_custom_call.1} parent=31 // pred_region
          %p411 = scmp.lt.s32.totalorder %s27, 3
          %s412 = scalar_select %p411, %s27, 3
          %s413 = scalar_lea.vmem %s6, %s412
        $region56: #{tpu_custom_call.1} parent=31 // pred_fallthru
          _
        // Predicated region
        $region57: #{tpu_custom_call.1} parent=31 // pred_check
          %p414 = pneg %p233
        $region58: #{tpu_custom_call.1} parent=31 // pred_check_branch
          %416 = sbr.rel (%p414) target = $region60
        $region59: #{tpu_custom_call.1} parent=31 // pred_region
          %p417 = scmp.lt.s32.totalorder %s27, 3
          %s418 = scalar_select %p417, %s27, 3
          %s419 = smul.addr %s418, 4
          %s420 = scalar_lea.vmem %s7, %s419
        $region60: #{tpu_custom_call.1} parent=31 // pred_fallthru
          _
      $region32: #{tpu_custom_call.1} parent=5 // pred_fallthru
        _
      %p421 = scmp.le.s32.totalorder 1, %s19
      %p422 = scmp.lt.s32.totalorder %s19, 5
      %p423 = pnand %p421, %p422
      %p424 = pneg %p423
      // Predicated region
      $region61: #{tpu_custom_call.1} parent=5 // pred_check
        _
      $region62: #{tpu_custom_call.1} parent=5 // pred_check_branch
        %426 = sbr.rel (%p423) target = $region64
      $region63: #{tpu_custom_call.1} parent=5 // pred_region
        %s427 = ssub.s32 %s19, 1
        // Predicated region
        $region65: #{tpu_custom_call.1} parent=63 // pred_check
          %p428 = pneg %p281
        $region66: #{tpu_custom_call.1} parent=63 // pred_check_branch
          %430 = sbr.rel (%p428) target = $region68
        $region67: #{tpu_custom_call.1} parent=63 // pred_region
          %432 = dma.done [#allocation5], 16
        $region68: #{tpu_custom_call.1} parent=63 // pred_fallthru
          _
        %433 = sfence
        %s434 = smul.u32 4, %s28
        %p435 = scmp.lt.s32.totalorder %s434, 3
        %s436 = scalar_select %p435, %s434, 3
        %s437 = smul.addr %s436, 8
        %s438 = scalar_lea.vmem %s0, %s437
        %p439 = pneg %p57
        %p440 = pneg %p54
        %p441 = scmp.lt.s32.totalorder %s29, 3
        %s442 = scalar_select %p441, %s29, 3
        %s443 = smul.addr %s442, 4
        %s444 = smul.addr %s443, 4
        %s445 = scalar_lea.vmem %s1, %s444
        %p446 = pneg %p83
        %p447 = pneg %p80
        %p448 = scmp.lt.s32.totalorder %s29, 3
        %s449 = scalar_select %p448, %s29, 3
        %s450 = smul.addr %s449, 4
        %s451 = smul.addr %s450, 4
        %s452 = scalar_lea.vmem %s2, %s451
        %p453 = pneg %p109
        %p454 = pneg %p106
        %p455 = scmp.lt.s32.totalorder %s29, 3
        %s456 = scalar_select %p455, %s29, 3
        %s457 = smul.addr %s456, 4
        %s458 = smul.addr %s457, 4
        %s459 = scalar_lea.vmem %s3, %s458
        %p460 = pneg %p135
        %p461 = pneg %p132
        %p462 = scmp.lt.s32.totalorder %s29, 3
        %s463 = scalar_select %p462, %s29, 3
        %s464 = scalar_lea.vmem %s4, %s463
        %p465 = pneg %p161
        %p466 = pneg %p158
        %p467 = scmp.lt.s32.totalorder %s29, 3
        %s468 = scalar_select %p467, %s29, 3
        %s469 = scalar_lea.vmem %s5, %s468
        %p470 = pneg %p187
        %p471 = pneg %p184
        %p472 = scmp.lt.s32.totalorder %s29, 3
        %s473 = scalar_select %p472, %s29, 3
        %s474 = scalar_lea.vmem %s6, %s473
        %p475 = pneg %p213
        %p476 = pneg %p210
        %p477 = scmp.lt.s32.totalorder %s29, 3
        %s478 = scalar_select %p477, %s29, 3
        %s479 = smul.addr %s478, 4
        %s480 = scalar_lea.vmem %s7, %s479
        %p481 = pneg %p239
        %p482 = pneg %p236
        %p483 = pneg %p260
        %p484 = pneg %p257
        %p485 = pneg %p281
        %p486 = pneg %p278
        %p487 = pneg %p302
        %p488 = pneg %p299
        %p489 = pneg %p328
        %p490 = pneg %p325
        %s491 = smul.u32 4, %s28
        %p492 = scmp.lt.s32.totalorder %s491, 3
        %s493 = scalar_select %p492, %s491, 3
        %s494 = smul.addr %s493, 8
        %s495 = scalar_lea.vmem %s0, %s494
        %s496 = smul.u32 4, %s28
        %p497 = scmp.lt.s32.totalorder %s29, 3
        %s498 = scalar_select %p497, %s29, 3
        %s499 = smul.addr %s498, 4
        %s500 = smul.addr %s499, 4
        %s501 = scalar_lea.vmem %s1, %s500
        %p502 = scmp.lt.s32.totalorder %s29, 3
        %s503 = scalar_select %p502, %s29, 3
        %s504 = smul.addr %s503, 4
        %s505 = smul.addr %s504, 4
        %s506 = scalar_lea.vmem %s2, %s505
        %p507 = scmp.lt.s32.totalorder %s29, 3
        %s508 = scalar_select %p507, %s29, 3
        %s509 = smul.addr %s508, 4
        %s510 = smul.addr %s509, 4
        %s511 = scalar_lea.vmem %s3, %s510
        %p512 = scmp.lt.s32.totalorder %s29, 3
        %s513 = scalar_select %p512, %s29, 3
        %s514 = scalar_lea.vmem %s4, %s513
        %p515 = scmp.lt.s32.totalorder %s29, 3
        %s516 = scalar_select %p515, %s29, 3
        %s517 = scalar_lea.vmem %s5, %s516
        %p518 = scmp.lt.s32.totalorder %s29, 3
        %s519 = scalar_select %p518, %s29, 3
        %s520 = scalar_lea.vmem %s6, %s519
        %p521 = scmp.lt.s32.totalorder %s29, 3
        %s522 = scalar_select %p521, %s29, 3
        %s523 = smul.addr %s522, 4
        %s524 = scalar_lea.vmem %s7, %s523
        %s525 = smul.u32 4, %s28
        %v527 = vld [vmem:[%s495] sm:$0xff]
        %v528 = vld [vmem:[%s495 + $0x8] sm:$0xff]
        %v529 = vld [vmem:[%s495 + $0x10] sm:$0xff]
        %v530 = vld [vmem:[%s495 + $0x18] sm:$0xff]
        %v531 = vpack.c.bf16 %v528, %v527
        %v532 = vpack.c.bf16 %v530, %v529
        %v533 = vld [vmem:[%s501] sm:$0xf]
        %v534 = vld [vmem:[%s501 + $0x4] sm:$0xf]
        %v535 = vld [vmem:[%s501 + $0x8] sm:$0xf]
        %v536 = vld [vmem:[%s501 + $0xc] sm:$0xf]
        %v537 = vld [vmem:[%s514] sm:$0x1]
        %v539 = vperm.slane %v537, 0
        %v545 = vunpack.c.l.b16 %v533
        %v546 = vunpack.c.l.b16 %v534
        %v547 = vunpack.c.l.b16 %v535
        %v548 = vunpack.c.l.b16 %v536
        %v549 = vpack.c.b16 %v546, %v545
        %v550 = vpack.c.b16 %v548, %v547
        %vm553 = vcmask 261120
        %v555 = vsel %vm553, %v531, 0
        %v558 = vsel %vm553, %v532, 0
        %560 = vmatpush.bf16.msra.mxu0 0
        %561 = vmatpush.bf16.msra.mxu0 0
        %562 = vmatpush.bf16.msra.mxu0 0
        %563 = vmatpush.bf16.msra.mxu0 0
        %564 = vmatpush.bf16.msra.mxu0 0
        %565 = vmatpush.bf16.msra.mxu0 0
        %566 = vmatpush.bf16.msra.mxu0 %v550
        %567 = vmatpush.bf16.msra.mxu0 %v549
        %568 = vmatmul.bf16.gmra.mxu0 %v555
        %v569 = vpop.f32.mrf.mxu0
        %v570 = vadd.f32 %v539, %v569
        %v571 = vpop.f32.mrf.mxu0
        %v572 = vadd.f32 %v539, %v571
        %573 = vmatmul.bf16.gmra.mxu0 %v558
        %v574 = vpop.f32.mrf.mxu0
        %v575 = vadd.f32 %v539, %v574
        %v576 = vpop.f32.mrf.mxu0
        %v577 = vadd.f32 %v539, %v576
        %578 = vdwg.mxu0
        %v579 = vpack.c.bf16 %v570, %v570
        %v580 = vpack.c.bf16 %v572, %v572
        %v581 = vpack.c.bf16 %v575, %v575
        %v582 = vpack.c.bf16 %v577, %v577
        %v583 = vld [vmem:[%s506] sm:$0xf]
        %v584 = vld [vmem:[%s506 + $0x4] sm:$0xf]
        %v585 = vld [vmem:[%s506 + $0x8] sm:$0xf]
        %v586 = vld [vmem:[%s506 + $0xc] sm:$0xf]
        %v587 = vld [vmem:[%s517] sm:$0x1]
        %v589 = vperm.slane %v587, 0
        %v595 = vunpack.c.l.b16 %v583
        %v596 = vunpack.c.l.b16 %v584
        %v597 = vunpack.c.l.b16 %v585
        %v598 = vunpack.c.l.b16 %v586
        %v599 = vpack.c.b16 %v596, %v595
        %v600 = vpack.c.b16 %v598, %v597
        %603 = vmatpush.bf16.msra.mxu0 0
        %604 = vmatpush.bf16.msra.mxu0 0
        %605 = vmatpush.bf16.msra.mxu0 0
        %606 = vmatpush.bf16.msra.mxu0 0
        %607 = vmatpush.bf16.msra.mxu0 0
        %608 = vmatpush.bf16.msra.mxu0 0
        %609 = vmatpush.bf16.msra.mxu0 %v600
        %610 = vmatpush.bf16.msra.mxu0 %v599
        %611 = vmatmul.bf16.gmra.mxu0 %v555
        %v612 = vpop.f32.mrf.mxu0
        %v613 = vadd.f32 %v589, %v612
        %v614 = vpop.f32.mrf.mxu0
        %v615 = vadd.f32 %v589, %v614
        %616 = vmatmul.bf16.gmra.mxu0 %v558
        %v617 = vpop.f32.mrf.mxu0
        %v618 = vadd.f32 %v589, %v617
        %v619 = vpop.f32.mrf.mxu0
        %v620 = vadd.f32 %v589, %v619
        %621 = vdwg.mxu0
        %v622 = vpack.c.bf16 %v613, %v613
        %v623 = vpack.c.bf16 %v615, %v615
        %v624 = vpack.c.bf16 %v618, %v618
        %v625 = vpack.c.bf16 %v620, %v620
        %v626 = vld [vmem:[%s511] sm:$0xf]
        %v627 = vld [vmem:[%s511 + $0x4] sm:$0xf]
        %v628 = vld [vmem:[%s511 + $0x8] sm:$0xf]
        %v629 = vld [vmem:[%s511 + $0xc] sm:$0xf]
        %v630 = vld [vmem:[%s520] sm:$0x1]
        %v632 = vperm.slane %v630, 0
        %v638 = vunpack.c.l.b16 %v626
        %v639 = vunpack.c.l.b16 %v627
        %v640 = vunpack.c.l.b16 %v628
        %v641 = vunpack.c.l.b16 %v629
        %v642 = vpack.c.b16 %v639, %v638
        %v643 = vpack.c.b16 %v641, %v640
        %646 = vmatpush.bf16.msra.mxu0 0
        %647 = vmatpush.bf16.msra.mxu0 0
        %648 = vmatpush.bf16.msra.mxu0 0
        %649 = vmatpush.bf16.msra.mxu0 0
        %650 = vmatpush.bf16.msra.mxu0 0
        %651 = vmatpush.bf16.msra.mxu0 0
        %652 = vmatpush.bf16.msra.mxu0 %v643
        %653 = vmatpush.bf16.msra.mxu0 %v642
        %654 = vmatmul.bf16.gmra.mxu0 %v555
        %v655 = vpop.f32.mrf.mxu0
        %v656 = vadd.f32 %v632, %v655
        %v657 = vpop.f32.mrf.mxu0
        %v658 = vadd.f32 %v632, %v657
        %659 = vmatmul.bf16.gmra.mxu0 %v558
        %v660 = vpop.f32.mrf.mxu0
        %v661 = vadd.f32 %v632, %v660
        %v662 = vpop.f32.mrf.mxu0
        %v663 = vadd.f32 %v632, %v662
        %664 = vdwg.mxu0
        %v665 = vpack.c.bf16 %v656, %v656
        %v666 = vpack.c.bf16 %v658, %v658
        %v667 = vpack.c.bf16 %v661, %v661
        %v668 = vpack.c.bf16 %v663, %v663
        %s669 = sld [smem:[#allocation3 + %s29]]
        %v670 = vld [vmem:[%s10] sm:$0xff]
        %v671 = vstv %s669
        %v672 = vmul.f32 %v671, %v670
        %vm673 = vcmask 64512
        %v675 = vsel %vm673, %v579, 0
        %v678 = vsel %vm673, %v622, 0
        %680 = vmatpush.bf16.xpose.msra.mxu0 0
        %681 = vmatpush.bf16.xpose.msra.mxu0 0
        %682 = vmatpush.bf16.xpose.msra.mxu0 0
        %683 = vmatpush.bf16.xpose.msra.mxu0 0
        %684 = vmatpush.bf16.xpose.msra.mxu0 0
        %685 = vmatpush.bf16.xpose.msra.mxu0 0
        %686 = vmatpush.bf16.xpose.msra.mxu0 0
        %687 = vmatpush.bf16.xpose.msra.mxu0 %v678
        %688 = vmatmul.bf16.gmra.mxu0 %v675
        %v689 = vpop.f32.mrf.mxu0
        %v690 = vadd.f32 %v672, %v689
        %v691 = vpop.f32.mrf.mxu0
        %692 = vdwg.mxu0
        %v694 = vsel %vm673, %v580, 0
        %v697 = vsel %vm673, %v623, 0
        %699 = vmatpush.bf16.xpose.msra.mxu0 0
        %700 = vmatpush.bf16.xpose.msra.mxu0 0
        %701 = vmatpush.bf16.xpose.msra.mxu0 0
        %702 = vmatpush.bf16.xpose.msra.mxu0 0
        %703 = vmatpush.bf16.xpose.msra.mxu0 0
        %704 = vmatpush.bf16.xpose.msra.mxu0 0
        %705 = vmatpush.bf16.xpose.msra.mxu0 0
        %706 = vmatpush.bf16.xpose.msra.mxu0 %v697
        %707 = vmatmul.bf16.gmra.mxu0 %v694
        %v708 = vpop.f32.mrf.mxu0
        %v709 = vadd.f32 %v672, %v708
        %v710 = vpop.f32.mrf.mxu0
        %711 = vdwg.mxu0
        %v713 = vsel %vm673, %v581, 0
        %v716 = vsel %vm673, %v624, 0
        %718 = vmatpush.bf16.xpose.msra.mxu0 0
        %719 = vmatpush.bf16.xpose.msra.mxu0 0
        %720 = vmatpush.bf16.xpose.msra.mxu0 0
        %721 = vmatpush.bf16.xpose.msra.mxu0 0
        %722 = vmatpush.bf16.xpose.msra.mxu0 0
        %723 = vmatpush.bf16.xpose.msra.mxu0 0
        %724 = vmatpush.bf16.xpose.msra.mxu0 0
        %725 = vmatpush.bf16.xpose.msra.mxu0 %v716
        %726 = vmatmul.bf16.gmra.mxu0 %v713
        %v727 = vpop.f32.mrf.mxu0
        %v728 = vadd.f32 %v672, %v727
        %v729 = vpop.f32.mrf.mxu0
        %730 = vdwg.mxu0
        %v732 = vsel %vm673, %v582, 0
        %v735 = vsel %vm673, %v625, 0
        %737 = vmatpush.bf16.xpose.msra.mxu0 0
        %738 = vmatpush.bf16.xpose.msra.mxu0 0
        %739 = vmatpush.bf16.xpose.msra.mxu0 0
        %740 = vmatpush.bf16.xpose.msra.mxu0 0
        %741 = vmatpush.bf16.xpose.msra.mxu0 0
        %742 = vmatpush.bf16.xpose.msra.mxu0 0
        %743 = vmatpush.bf16.xpose.msra.mxu0 0
        %744 = vmatpush.bf16.xpose.msra.mxu0 %v735
        %745 = vmatmul.bf16.gmra.mxu0 %v732
        %v746 = vpop.f32.mrf.mxu0
        %v747 = vadd.f32 %v672, %v746
        %v748 = vpop.f32.mrf.mxu0
        %749 = vdwg.mxu0
        %v750 = vsel %vm673, %v690, -inf
        %751 = vmax.xlane.f32.xlu0 %v750
        %v752 = vpop.xlane.xlu0 %751
        %v753 = vsel %vm673, %v709, -inf
        %754 = vmax.xlane.f32.xlu0 %v753
        %v755 = vpop.xlane.xlu0 %754
        %v756 = vsel %vm673, %v728, -inf
        %757 = vmax.xlane.f32.xlu0 %v756
        %v758 = vpop.xlane.xlu0 %757
        %v759 = vsel %vm673, %v747, -inf
        %760 = vmax.xlane.f32.xlu0 %v759
        %v761 = vpop.xlane.xlu0 %760
        %v762 = vsub.f32 %v690, %v752
        %v763 = vsub.f32 %v709, %v755
        %v764 = vsub.f32 %v728, %v758
        %v765 = vsub.f32 %v747, %v761
        %v766 = vmul.f32 %v762, 1.442695
        %v767 = vpow.pop %v766
        %v768 = vmul.f32 %v763, 1.442695
        %v769 = vpow.pop %v768
        %v770 = vmul.f32 %v764, 1.442695
        %v771 = vpow.pop %v770
        %v772 = vmul.f32 %v765, 1.442695
        %v773 = vpow.pop %v772
        %v774 = vsel %vm673, %v767, 0.0
        %775 = vadd.xlane.f32.xlu0 %v774
        %v776 = vpop.xlane.xlu0 %775
        %v777 = vsel %vm673, %v769, 0.0
        %778 = vadd.xlane.f32.xlu0 %v777
        %v779 = vpop.xlane.xlu0 %778
        %v780 = vsel %vm673, %v771, 0.0
        %781 = vadd.xlane.f32.xlu0 %v780
        %v782 = vpop.xlane.xlu0 %781
        %v783 = vsel %vm673, %v773, 0.0
        %784 = vadd.xlane.f32.xlu0 %v783
        %v785 = vpop.xlane.xlu0 %784
        %v786 = vrcp.pop %v776
        %v787 = vrcp.pop %v779
        %v788 = vrcp.pop %v782
        %v789 = vrcp.pop %v785
        %v790 = vmul.f32 %v767, %v786
        %v791 = vmul.f32 %v769, %v787
        %v792 = vmul.f32 %v771, %v788
        %v793 = vmul.f32 %v773, %v789
        %v794 = vpack.c.bf16 %v790, %v790
        %v795 = vpack.c.bf16 %v791, %v791
        %v796 = vpack.c.bf16 %v792, %v792
        %v797 = vpack.c.bf16 %v793, %v793
        %v799 = vsel %vm673, %v794, 0
        %vm801 = vcmask 1043456
        %v803 = vsel %vm801, %v665, 0
        %805 = vmatpush.bf16.msra.mxu0 0
        %806 = vmatpush.bf16.msra.mxu0 0
        %807 = vmatpush.bf16.msra.mxu0 0
        %808 = vmatpush.bf16.msra.mxu0 0
        %809 = vmatpush.bf16.msra.mxu0 0
        %810 = vmatpush.bf16.msra.mxu0 0
        %811 = vmatpush.bf16.msra.mxu0 0
        %812 = vmatpush.bf16.msra.mxu0 %v803
        %813 = vmatmul.bf16.gmra.mxu0 %v799
        %v814 = vpop.f32.mrf.mxu0
        %v815 = vadd.f32 0.0, %v814
        %v816 = vpop.f32.mrf.mxu0
        %817 = vdwg.mxu0
        %v819 = vsel %vm673, %v795, 0
        %v822 = vsel %vm801, %v666, 0
        %824 = vmatpush.bf16.msra.mxu0 0
        %825 = vmatpush.bf16.msra.mxu0 0
        %826 = vmatpush.bf16.msra.mxu0 0
        %827 = vmatpush.bf16.msra.mxu0 0
        %828 = vmatpush.bf16.msra.mxu0 0
        %829 = vmatpush.bf16.msra.mxu0 0
        %830 = vmatpush.bf16.msra.mxu0 0
        %831 = vmatpush.bf16.msra.mxu0 %v822
        %832 = vmatmul.bf16.gmra.mxu0 %v819
        %v833 = vpop.f32.mrf.mxu0
        %v834 = vadd.f32 0.0, %v833
        %v835 = vpop.f32.mrf.mxu0
        %836 = vdwg.mxu0
        %v838 = vsel %vm673, %v796, 0
        %v841 = vsel %vm801, %v667, 0
        %843 = vmatpush.bf16.msra.mxu0 0
        %844 = vmatpush.bf16.msra.mxu0 0
        %845 = vmatpush.bf16.msra.mxu0 0
        %846 = vmatpush.bf16.msra.mxu0 0
        %847 = vmatpush.bf16.msra.mxu0 0
        %848 = vmatpush.bf16.msra.mxu0 0
        %849 = vmatpush.bf16.msra.mxu0 0
        %850 = vmatpush.bf16.msra.mxu0 %v841
        %851 = vmatmul.bf16.gmra.mxu0 %v838
        %v852 = vpop.f32.mrf.mxu0
        %v853 = vadd.f32 0.0, %v852
        %v854 = vpop.f32.mrf.mxu0
        %855 = vdwg.mxu0
        %v857 = vsel %vm673, %v797, 0
        %v860 = vsel %vm801, %v668, 0
        %862 = vmatpush.bf16.msra.mxu0 0
        %863 = vmatpush.bf16.msra.mxu0 0
        %864 = vmatpush.bf16.msra.mxu0 0
        %865 = vmatpush.bf16.msra.mxu0 0
        %866 = vmatpush.bf16.msra.mxu0 0
        %867 = vmatpush.bf16.msra.mxu0 0
        %868 = vmatpush.bf16.msra.mxu0 0
        %869 = vmatpush.bf16.msra.mxu0 %v860
        %870 = vmatmul.bf16.gmra.mxu0 %v857
        %v871 = vpop.f32.mrf.mxu0
        %v872 = vadd.f32 0.0, %v871
        %v873 = vpop.f32.mrf.mxu0
        %874 = vdwg.mxu0
        %v875 = vpack.c.bf16 %v834, %v815
        %v876 = vpack.c.bf16 %v872, %v853
        %p877 = scmp.eq.s32.totalorder %s29, 0
        // Predicated region
        $region69: #{tpu_custom_call.1} parent=63 // pred_check
          %p878 = pneg %p877
        $region70: #{tpu_custom_call.1} parent=63 // pred_check_branch
          %880 = sbr.rel (%p878) target = $region72
        $region71: #{tpu_custom_call.1} parent=63 // pred_region
          %881 = vst.msk [vmem:[#allocation2] sm:$0xff] %vm553, 0.0
          %882 = vst.msk [vmem:[#allocation2 + $0x8] sm:$0xff] %vm553, 0.0
          %883 = vst.msk [vmem:[#allocation2 + $0x10] sm:$0xff] %vm553, 0.0
          %884 = vst.msk [vmem:[#allocation2 + $0x18] sm:$0xff] %vm553, 0.0
        $region72: #{tpu_custom_call.1} parent=63 // pred_fallthru
          _
        %v885 = vld [vmem:[#allocation2] sm:$0xff]
        %v886 = vld [vmem:[#allocation2 + $0x8] sm:$0xff]
        %v887 = vld [vmem:[#allocation2 + $0x10] sm:$0xff]
        %v888 = vld [vmem:[#allocation2 + $0x18] sm:$0xff]
        %v889 = vld [vmem:[%s524] sm:$0xf]
        %v891 = vsel %vm673, %v875, 0
        %v894 = vsel %vm673, %v876, 0
        %v897 = vsel %vm801, %v889, 0
        %899 = vmatpush.bf16.msra.mxu0 0
        %900 = vmatpush.bf16.msra.mxu0 0
        %901 = vmatpush.bf16.msra.mxu0 0
        %902 = vmatpush.bf16.msra.mxu0 0
        %903 = vmatpush.bf16.msra.mxu0 0
        %904 = vmatpush.bf16.msra.mxu0 0
        %905 = vmatpush.bf16.msra.mxu0 0
        %906 = vmatpush.bf16.msra.mxu0 %v897
        %907 = vmatmul.bf16.gmra.mxu0 %v891
        %v908 = vpop.f32.mrf.mxu0
        %v909 = vadd.f32 0.0, %v908
        %v910 = vpop.f32.mrf.mxu0
        %v911 = vadd.f32 0.0, %v910
        %912 = vmatmul.bf16.gmra.mxu0 %v894
        %v913 = vpop.f32.mrf.mxu0
        %v914 = vadd.f32 0.0, %v913
        %v915 = vpop.f32.mrf.mxu0
        %v916 = vadd.f32 0.0, %v915
        %917 = vdwg.mxu0
        %v918 = vadd.f32 %v885, %v909
        %v919 = vadd.f32 %v886, %v911
        %v920 = vadd.f32 %v887, %v914
        %v921 = vadd.f32 %v888, %v916
        %922 = vst.msk [vmem:[#allocation2] sm:$0xff] %vm553, %v918
        %923 = vst.msk [vmem:[#allocation2 + $0x8] sm:$0xff] %vm553, %v919
        %924 = vst.msk [vmem:[#allocation2 + $0x10] sm:$0xff] %vm553, %v920
        %925 = vst.msk [vmem:[#allocation2 + $0x18] sm:$0xff] %vm553, %v921
        %p926 = scmp.eq.s32.totalorder %s29, 3
        // Predicated region
        $region73: #{tpu_custom_call.1} parent=63 // pred_check
          %p927 = pneg %p926
        $region74: #{tpu_custom_call.1} parent=63 // pred_check_branch
          %929 = sbr.rel (%p927) target = $region76
        $region75: #{tpu_custom_call.1} parent=63 // pred_region
          %v930 = vld [vmem:[#allocation2] sm:$0xff]
          %v931 = vld [vmem:[#allocation2 + $0x8] sm:$0xff]
          %v932 = vld [vmem:[#allocation2 + $0x10] sm:$0xff]
          %v933 = vld [vmem:[#allocation2 + $0x18] sm:$0xff]
          %v934 = vld [vmem:[%s8] sm:$0x1]
          %v936 = vperm.slane %v934, 0
          %v938 = vadd.f32 %v930, %v936
          %v939 = vadd.f32 %v931, %v936
          %v940 = vadd.f32 %v932, %v936
          %v941 = vadd.f32 %v933, %v936
          %942 = vst.msk [vmem:[#allocation6] sm:$0xff] %vm553, %v938
          %943 = vst.msk [vmem:[#allocation6 + $0x8] sm:$0xff] %vm553, %v939
          %944 = vst.msk [vmem:[#allocation6 + $0x10] sm:$0xff] %vm553, %v940
          %945 = vst.msk [vmem:[#allocation6 + $0x18] sm:$0xff] %vm553, %v941
        $region76: #{tpu_custom_call.1} parent=63 // pred_fallthru
          _
        // Predicated region
        $region77: #{tpu_custom_call.1} parent=63 // pred_check
          %p946 = pneg %p325
        $region78: #{tpu_custom_call.1} parent=63 // pred_check_branch
          %948 = sbr.rel (%p946) target = $region80
        $region79: #{tpu_custom_call.1} parent=63 // pred_region
          %s949 = smul.u32 4, %s28
          %951 = vsyncadd [#allocation4], 0
          %s952 = smul.addr %s949, 8
          %s953 = scalar_lea.hbm %s11, %s952
          %s954 = sshll.u32 [#allocation6], 4
          %s955 = int_to_ptr.vmem [resolvable:$true] %s954
          %s956 = sshll.u32 %s953, 4
          %s957 = int_to_ptr.hbm [resolvable:$true] %s956
          %962 = dma.vmem_to_hbm [thread:$0]  %s955, 512, %s957, [#allocation4], 128, 128, 8
        $region80: #{tpu_custom_call.1} parent=63 // pred_fallthru
          _
        // Predicated region
        $region81: #{tpu_custom_call.1} parent=63 // pred_check
          %p963 = pneg %p325
        $region82: #{tpu_custom_call.1} parent=63 // pred_check_branch
          %965 = sbr.rel (%p963) target = $region84
        $region83: #{tpu_custom_call.1} parent=63 // pred_region
          %967 = dma.done [#allocation4], 512
        $region84: #{tpu_custom_call.1} parent=63 // pred_fallthru
          _
      $region64: #{tpu_custom_call.1} parent=5 // pred_fallthru
        _
      %p968 = scmp.le.s32.totalorder 2, %s19
      // Predicated region
      $region85: #{tpu_custom_call.1} parent=5 // pred_check
        %p969 = pneg %p968
      $region86: #{tpu_custom_call.1} parent=5 // pred_check_branch
        %971 = sbr.rel (%p969) target = $region88
      $region87: #{tpu_custom_call.1} parent=5 // pred_region
        %s972 = ssub.s32 %s19, 2
      $region88: #{tpu_custom_call.1} parent=5 // pred_fallthru
        _
    $region6: #{tpu_custom_call.1} parent=1 // loop_footer
      %s23 = sadd.s32 1, %s19
    $region7: #{tpu_custom_call.1} parent=1 // loop_footer_branch
      %18 = sbr.rel target = $region3
    $region8: #{tpu_custom_call.1} parent=1 // loop_exit
      _
    %973 = vsyncpa [#allocation4], 1
    %s974 = scalar_lea.sflag [#allocation4], 1
    %975 = vsyncpa %s974, 1
    %976 = vsyncpa [#allocation5], 1
    %s977 = scalar_lea.sflag [#allocation5], 1
    %978 = vsyncpa %s977, 1

</llo_original>
